<compile_context>
chip_gen: v6e
topology: v6e:2x2x1
jax: 0.10.0
libtpu: 0.0.40
codegen_flags: <defaults>
</compile_context>

<pallas_src>
import jax
import jax.numpy as jnp
from jax.experimental import pallas as pl
from jax.experimental.pallas import tpu as pltpu


def _round_up(x: int, m: int) -> int:
    return (x + m - 1) // m * m


def _vmem_limit_bytes() -> int:
    """~half of physical VMEM: ~64 MiB on v5e/v6e (128 MiB), ~32 MiB on v7x (64 MiB)."""
    try:
        cap = int(pltpu.get_tpu_info().vmem_capacity_bytes)
        return max(32 * 1024 * 1024, min(96 * 1024 * 1024, cap // 2))
    except Exception:
        return 32 * 1024 * 1024


# ---------------------------------------------------------------------------
# Kernels
# ---------------------------------------------------------------------------

def _linear_bias_kernel(x_ref, w_ref, b_ref, o_ref):
    """Single-K-tile path: one MXU matmul + bias add + store.  No scratch."""
    o_ref[...] = (
        jnp.dot(x_ref[...], w_ref[...], preferred_element_type=jnp.float32)
        + b_ref[...]
    ).astype(o_ref.dtype)


def _linear_bias_acc_out_kernel(x_ref, w_ref, b_ref, o_ref):
    """Tiled path, f32 output: accumulate directly into the resident o_ref
    (its index_map ignores k) -- no VMEM scratch buffer needed."""
    k = pl.program_id(2)

    @pl.when(k == 0)
    def _():
        o_ref[...] = jnp.zeros_like(o_ref)

    o_ref[...] += jnp.dot(x_ref[...], w_ref[...],
                          preferred_element_type=jnp.float32)

    @pl.when(k == pl.num_programs(2) - 1)
    def _():
        o_ref[...] += b_ref[...]   # bias added once per output tile


def _linear_bias_acc_scratch_kernel(x_ref, w_ref, b_ref, o_ref, acc_ref):
    """Tiled path, non-f32 output: f32 scratch accumulator, single cast on store."""
    k = pl.program_id(2)

    @pl.when(k == 0)
    def _():
        acc_ref[...] = jnp.zeros_like(acc_ref)

    acc_ref[...] += jnp.dot(x_ref[...], w_ref[...],
                            preferred_element_type=jnp.float32)

    @pl.when(k == pl.num_programs(2) - 1)
    def _():
        o_ref[...] = (acc_ref[...] + b_ref[...]).astype(o_ref.dtype)


# ---------------------------------------------------------------------------
# Wrapper
# ---------------------------------------------------------------------------

# Large default tiles: ~0.35us/grid-step amortized, 256-aligned K/N for the
# v6e/v7x 256x256 MXU, still well under VMEM budget when double-buffered.
_TM, _TN, _TK = 512, 512, 512


def prepare_linear_params(weight, bias, *, compute_dtype=None,
                          tm=_TM, tn=_TN, tk=_TK):
    """One-time prep of nn.Linear params (padding/casting happens HERE, not per call).

    weight: [Out, In] (PyTorch layout), bias: [Out].
    compute_dtype: optional low-precision MXU input dtype (e.g. jnp.bfloat16);
                   accumulation and bias add stay f32.
    """
    out_f, in_f = weight.shape
    w_t = weight.T                                    # [In, Out] so y = x @ w_t
    if compute_dtype is not None:
        w_t = w_t.astype(compute_dtype)
    b = bias.astype(jnp.float32).reshape(1, out_f)

    if in_f <= tk and out_f <= tn:
        # Fast path: single K/N tile.  Keep params fully unpadded; full-array
        # blocks are always legal and avoid all padded-copy HBM traffic.
        return dict(kind="single", w=w_t, b=b, in_features=in_f,
                    out_features=out_f, compute_dtype=compute_dtype, tm=tm)

    # General tiled path: pad weight/bias once to tile-aligned, lane-dense shapes.
    tn = min(tn, _round_up(out_f, 128))
    tk = min(tk, _round_up(in_f, 128))
    kp = _round_up(in_f, tk)
    np_ = _round_up(out_f, tn)
    w_pad = jnp.zeros((kp, np_), w_t.dtype).at[:in_f, :out_f].set(w_t)
    b_pad = jnp.zeros((1, np_), jnp.float32).at[:, :out_f].set(b)
    return dict(kind="tiled", w=w_pad, b=b_pad, in_features=in_f,
                out_features=out_f, compute_dtype=compute_dtype,
                tm=tm, tn=tn, tk=tk, kp=kp, np=np_)


def linear_forward(x, params):
    """y = x @ W^T + b.  ReLU intentionally NOT applied (matches forward())."""
    B, in_f = x.shape
    assert in_f == params["in_features"], (in_f, params["in_features"])
    out_f = params["out_features"]
    out_dtype = x.dtype                      # capture before any compute-dtype cast
    if params["compute_dtype"] is not None:
        x = x.astype(params["compute_dtype"])
    w, b = params["w"], params["b"]

    cost = pl.CostEstimate(
        flops=2 * B * in_f * out_f,
        transcendentals=0,
        bytes_accessed=(x.size * x.dtype.itemsize + w.size * w.dtype.itemsize
                        + b.size * 4 + B * out_f * jnp.dtype(out_dtype).itemsize),
    )
    vmem_limit = _vmem_limit_bytes()

    # ---------------- fast path: whole K and N fit in one tile ----------------
    if params["kind"] == "single":
        tm = params["tm"]
        if B <= tm:
            # No grid, no padding, no scratch: everything lives in VMEM whole.
            return pl.pallas_call(
                _linear_bias_kernel,
                out_shape=jax.ShapeDtypeStruct((B, out_f), out_dtype),
                cost_estimate=cost,
                compiler_params=pltpu.CompilerParams(
                    vmem_limit_bytes=vmem_limit),
            )(x, w, b)

        # Large batch: grid over M only; weight/bias stay resident in VMEM.
        grid = (pl.cdiv(B, tm),)
        return pl.pallas_call(
            _linear_bias_kernel,
            out_shape=jax.ShapeDtypeStruct((B, out_f), out_dtype),
            grid_spec=pltpu.PrefetchScalarGridSpec(
                num_scalar_prefetch=0,
                grid=grid,
                in_specs=[
                    pl.BlockSpec((tm, in_f), lambda i: (i, 0)),     # x tile
                    pl.BlockSpec((in_f, out_f), lambda i: (0, 0)),  # full weight
                    pl.BlockSpec((1, out_f), lambda i: (0, 0)),     # full bias
                ],
                out_specs=pl.BlockSpec((tm, out_f), lambda i: (i, 0)),
            ),
            cost_estimate=cost,
            compiler_params=pltpu.CompilerParams(
                dimension_semantics=("parallel",),
                vmem_limit_bytes=vmem_limit),
        )(x, w, b)

    # ---------------- general tiled path: (M, N, K) grid, K last --------------
    tm, tn, tk = params["tm"], params["tn"], params["tk"]
    kp, np_ = params["kp"], params["np"]

    # bf16 packs 16 rows per vreg sublane group, f32 packs 8.
    sub = 16 if jnp.dtype(x.dtype).itemsize == 2 else 8
    bp = _round_up(B, sub)
    tm = min(tm, bp)

    # Only the K (reduction) axis MUST be zero-padded for correctness; B is
    # padded at most to the next sublane multiple (single fused pad op on x).
    xp = jnp.zeros((bp, kp), x.dtype).at[:B, :in_f].set(x)

    grid = (pl.cdiv(bp, tm), np_ // tn, kp // tk)

    if out_dtype == jnp.float32:
        kernel = _linear_bias_acc_out_kernel
        scratch = []                                   # accumulate into o_ref
    else:
        kernel = _linear_bias_acc_scratch_kernel
        scratch = [pltpu.VMEM((tm, tn), jnp.float32)]

    out_padded = pl.pallas_call(
        kernel,
        out_shape=jax.ShapeDtypeStruct((bp, np_), out_dtype),
        grid_spec=pltpu.PrefetchScalarGridSpec(
            num_scalar_prefetch=0,
            grid=grid,
            in_specs=[
                pl.BlockSpec((tm, tk), lambda i, j, k: (i, k)),    # x tile
                # If profiling shows exposed w-tile DMA at small tm, add
                # pipeline_mode=pl.Buffered(3) on this spec (K is innermost).
                pl.BlockSpec((tk, tn), lambda i, j, k: (k, j)),    # w tile
                pl.BlockSpec((1, tn), lambda i, j, k: (0, j)),     # bias tile
            ],
            out_specs=pl.BlockSpec((tm, tn), lambda i, j, k: (i, j)),
            scratch_shapes=scratch,
        ),
        cost_estimate=cost,
        compiler_params=pltpu.CompilerParams(
            dimension_semantics=("parallel", "parallel", "arbitrary"),
            vmem_limit_bytes=vmem_limit),
    )(xp, w, b)

    return out_padded[:B, :out_f]


# ---------------------------------------------------------------------------
# Self-test
# ---------------------------------------------------------------------------

if __name__ == "__main__":
    key = jax.random.PRNGKey(0)
    k_x, k_w, k_b, k_x2, k_w2, k_b2, k_x3 = jax.random.split(key, 7)

    # ------ module-consistent shapes: Linear(5, 5), batch=8 (fast path) ------
    in_features, out_features, batch = 5, 5, 8
    bound = 1.0 / jnp.sqrt(jnp.float32(in_features))
    w = jax.random.uniform(k_w, (out_features, in_features), jnp.float32, -bound, bound)
    b = jax.random.uniform(k_b, (out_features,), jnp.float32, -bound, bound)
    x = jax.random.normal(k_x, (batch, in_features), jnp.float32)

    ref = jnp.dot(x, w.T, precision=jax.lax.Precision.HIGHEST) + b

    params_f32 = prepare_linear_params(w, b)
    out = jax.block_until_ready(linear_forward(x, params_f32))
    assert out.shape == (batch, out_features)
    assert jnp.allclose(out, ref, atol=1e-4, rtol=1e-4)

    # bf16-compute variant (bandwidth path on v5e/v6e/v7x), f32 accumulation.
    params_bf16 = prepare_linear_params(w, b, compute_dtype=jnp.bfloat16)
    out_bf16 = jax.block_until_ready(linear_forward(x, params_bf16))
    assert out_bf16.shape == (batch, out_features)
    assert jnp.allclose(out_bf16, ref, atol=5e-2, rtol=5e-2)

    # ------ fast path, grid over M (large-batch branch; partial M tail) ------
    params_small_tm = prepare_linear_params(w, b, tm=16)
    x_big = jax.random.normal(k_x3, (40, in_features), jnp.float32)
    ref_big = jnp.dot(x_big, w.T, precision=jax.lax.Precision.HIGHEST) + b
    out_big = jax.block_until_ready(linear_forward(x_big, params_small_tm))
    assert out_big.shape == (40, out_features)
    assert jnp.allclose(out_big, ref_big, atol=1e-4, rtol=1e-4)

    # ------ general tiled path (multi-K / multi-N grid, ragged M/N/K) --------
    in2, out2, batch2 = 300, 200, 44
    bound2 = 1.0 / jnp.sqrt(jnp.float32(in2))
    w2 = jax.random.uniform(k_w2, (out2, in2), jnp.float32, -bound2, bound2)
    b2 = jax.random.uniform(k_b2, (out2,), jnp.float32, -bound2, bound2)
    x2 = jax.random.normal(k_x2, (batch2, in2), jnp.float32)
    ref2 = jnp.dot(x2, w2.T, precision=jax.lax.Precision.HIGHEST) + b2

    params2 = prepare_linear_params(w2, b2, tn=128, tk=128)   # forces tiled path
    out2_arr = jax.block_until_ready(linear_forward(x2, params2))
    assert out2_arr.shape == (batch2, out2)
    assert jnp.allclose(out2_arr, ref2, atol=1e-3, rtol=1e-3)

    print("KERNEL_OK")
</pallas_src>

<mosaic_0001>
module attributes {stable_mosaic.version = 11 : i64} {
  func.func @_linear_bias_kernel(%arg0: memref<8x5xf32, #tpu.memory_space<vmem>>, %arg1: memref<5x5xf32, #tpu.memory_space<vmem>>, %arg2: memref<1x5xf32, #tpu.memory_space<vmem>>, %arg3: memref<8x5xf32, #tpu.memory_space<vmem>>) attributes {dimension_semantics = [], scalar_prefetch = 0 : i64, scratch_operands = 0 : i64, tpu.core_type = #tpu.core_type<tc>} {
    %c0 = arith.constant 0 : index
    %c0_0 = arith.constant 0 : index
    %0 = vector.load %arg0[%c0, %c0_0] : memref<8x5xf32, #tpu.memory_space<vmem>>, vector<8x5xf32>
    %c0_1 = arith.constant 0 : index
    %c0_2 = arith.constant 0 : index
    %1 = vector.load %arg1[%c0_1, %c0_2] : memref<5x5xf32, #tpu.memory_space<vmem>>, vector<5x5xf32>
    %cst = arith.constant dense<0.000000e+00> : vector<8x5xf32>
    %2 = tpu.matmul %0, %1, %cst {dimension_numbers = #tpu.dot_dimension_numbers<[1], [0], [0], [1], [0, 0, 1, 1], [], []>} : vector<8x5xf32>, vector<5x5xf32>, vector<8x5xf32> -> vector<8x5xf32>
    %c0_3 = arith.constant 0 : index
    %c0_4 = arith.constant 0 : index
    %3 = vector.load %arg2[%c0_3, %c0_4] : memref<1x5xf32, #tpu.memory_space<vmem>>, vector<1x5xf32>
    %4 = vector.broadcast %3 : vector<1x5xf32> to vector<8x5xf32>
    %5 = arith.addf %2, %4 : vector<8x5xf32>
    %c0_5 = arith.constant 0 : index
    %c0_6 = arith.constant 0 : index
    %6 = vector.load %arg3[%c0_5, %c0_6] : memref<8x5xf32, #tpu.memory_space<vmem>>, vector<8x5xf32>
    tpu.vector_store %arg3[%c0_5, %c0_6], %5 {strides = array<i32>} : memref<8x5xf32, #tpu.memory_space<vmem>>, vector<8x5xf32>,
    return
  }
}

</mosaic_0001>

<llo_original>
// kernel: tpu_custom_call.1
$region0: #{tpu_custom_call.1}
  #allocation0 [shape = 'u32[]', space=smem, size = 0x4, offset = 0x4, fixed_abs, tag = 'smem constant byte address 0x4 - core index']
  #allocation1 [shape = 'u32[144,128]{1,0:T(1,128)}', space=vmem, size = 0x12000, scoped, tag = 'internal scratch']
  %s0 = inlined_call_operand.hbm [shape: f32[8,5], index: 0, kind: input, shape index: {}]
  %s1 = inlined_call_operand.hbm [shape: f32[5,5], index: 1, kind: input, shape index: {}]
  %s2 = inlined_call_operand.vmem [shape: f32[1,5], index: 2, kind: input, shape index: {}]
  %s3 = inlined_call_operand.hbm [shape: f32[8,5], index: 3, kind: output, shape index: {}]
  %s4 = sld [smem:[#allocation0]]
  $region30: #{tpu_custom_call.1} parent=0
    _
  %s6 = ssub.s32 1, %s4
  %s7 = scalar_select 0, %s6, %s4
  $region1: #{tpu_custom_call.1} parent=0
    #allocation2 [shape = 'u8[4096]{0}', space=vmem, size = 0x1000, scoped, tag = 'input window, operand 0, single buffered']
    #allocation3 [shape = 's32[1]{0}', space=sflag, size = 0x4, scoped, tag = 'scoped memory for tpu_custom_call.1']
    #allocation4 [shape = 's32[1]{0}', space=sflag, size = 0x4, scoped, tag = 'scoped memory for tpu_custom_call.1']
    #allocation5 [shape = 'u8[4096]{0}', space=vmem, size = 0x1000, scoped, tag = 'input window, operand 1, single buffered']
    #allocation6 [shape = 's32[1]{0}', space=sflag, size = 0x4, scoped, tag = 'scoped memory for tpu_custom_call.1']
    #allocation7 [shape = 'u8[4096]{0}', space=vmem, size = 0x1000, scoped, tag = 'output window, operand 0, single buffered']
    %8 = vsyncpa [#allocation3], 0
    %9 = vsyncpa [#allocation6], 0
    %10 = vsyncpa [#allocation4], 0
    // Predicated region
    $region2: #{tpu_custom_call.1} parent=1 // pred_check
      _
    $region3: #{tpu_custom_call.1} parent=1 // pred_check_branch
      %12 = sbr.rel (0) target = $region5
    $region4: #{tpu_custom_call.1} parent=1 // pred_region
      %s14 = ssub.s32 128, 128
      %15 = vsyncadd [#allocation3], %s14
      %s17 = sshll.u32 [#allocation2], 4
      %s18 = int_to_ptr.vmem [resolvable:$true] %s17
      %20 = dma.hbm_to_vmem [thread:$0]  %s0, 128, %s18, [#allocation3]
    $region5: #{tpu_custom_call.1} parent=1 // pred_fallthru
      _
    // Predicated region
    $region6: #{tpu_custom_call.1} parent=1 // pred_check
      _
    $region7: #{tpu_custom_call.1} parent=1 // pred_check_branch
      %22 = sbr.rel (0) target = $region9
    $region8: #{tpu_custom_call.1} parent=1 // pred_region
      %s24 = ssub.s32 128, 128
      %25 = vsyncadd [#allocation6], %s24
      %s27 = sshll.u32 [#allocation5], 4
      %s28 = int_to_ptr.vmem [resolvable:$true] %s27
      %30 = dma.hbm_to_vmem [thread:$0]  %s1, 128, %s28, [#allocation6]
    $region9: #{tpu_custom_call.1} parent=1 // pred_fallthru
      _
    // Predicated region
    $region10: #{tpu_custom_call.1} parent=1 // pred_check
      _
    $region11: #{tpu_custom_call.1} parent=1 // pred_check_branch
      %32 = sbr.rel (0) target = $region13
    $region12: #{tpu_custom_call.1} parent=1 // pred_region
      _
    $region13: #{tpu_custom_call.1} parent=1 // pred_fallthru
      _
    // Predicated region
    $region14: #{tpu_custom_call.1} parent=1 // pred_check
      _
    $region15: #{tpu_custom_call.1} parent=1 // pred_check_branch
      %34 = sbr.rel (0) target = $region17
    $region16: #{tpu_custom_call.1} parent=1 // pred_region
      %35 = dma.done [#allocation3], 128
    $region17: #{tpu_custom_call.1} parent=1 // pred_fallthru
      _
    // Predicated region
    $region18: #{tpu_custom_call.1} parent=1 // pred_check
      _
    $region19: #{tpu_custom_call.1} parent=1 // pred_check_branch
      %37 = sbr.rel (0) target = $region21
    $region20: #{tpu_custom_call.1} parent=1 // pred_region
      %38 = dma.done [#allocation6], 128
    $region21: #{tpu_custom_call.1} parent=1 // pred_fallthru
      _
    %v39 = vld [vmem:[#allocation2] sm:$0xff]
    %v40 = vld [vmem:[#allocation5] sm:$0x1f]
    %v41 = vld [vmem:[%s2] sm:$0x1]
    %v43 = vlaneseq
    %v44 = vshrl.u32 %v43, 7
    %v45 = vsub.s32 0, %v44
    %v46 = vrot.slane %v41, %v45
    %vm48 = vcmask 39936
    %v50 = vsel %vm48, %v39, 0
    %vm52 = vcmask 1044480
    %v54 = vsel %vm52, %v40, 0
    %56 = vmatprep.subr.mxu0 0.0
    %57 = vmatpush1.msra.mxu0 0.0
    %58 = vmatprep.subr.mxu0 0.0
    %59 = vmatpush1.msra.mxu0 0.0
    %60 = vmatprep.subr.mxu0 0.0
    %61 = vmatpush1.msra.mxu0 0.0
    %62 = vmatprep.subr.mxu0 0.0
    %63 = vmatpush1.msra.mxu0 0.0
    %64 = vmatprep.subr.mxu0 0.0
    %65 = vmatpush1.msra.mxu0 0.0
    %66 = vmatprep.subr.mxu0 0.0
    %67 = vmatpush1.msra.mxu0 0.0
    %68 = vmatprep.subr.mxu0 0.0
    %69 = vmatpush1.msra.mxu0 0.0
    %70 = vmatprep.subr.mxu0 0.0
    %71 = vmatpush1.msra.mxu0 0.0
    %72 = vmatprep.subr.mxu0 0.0
    %73 = vmatpush1.msra.mxu0 0.0
    %74 = vmatprep.subr.mxu0 0.0
    %75 = vmatpush1.msra.mxu0 0.0
    %76 = vmatprep.subr.mxu0 0.0
    %77 = vmatpush1.msra.mxu0 0.0
    %78 = vmatprep.subr.mxu0 0.0
    %79 = vmatpush1.msra.mxu0 0.0
    %80 = vmatprep.subr.mxu0 0.0
    %81 = vmatpush1.msra.mxu0 0.0
    %82 = vmatprep.subr.mxu0 0.0
    %83 = vmatpush1.msra.mxu0 0.0
    %84 = vmatprep.subr.mxu0 0.0
    %85 = vmatpush1.msra.mxu0 0.0
    %86 = vmatprep.subr.mxu0 0.0
    %87 = vmatpush1.msra.mxu0 %v54
    %88 = vmatprep.subr.mxu0 0.0
    %89 = vmatpush2.msra.mxu0 0.0
    %90 = vmatprep.subr.mxu0 0.0
    %91 = vmatpush2.msra.mxu0 0.0
    %92 = vmatprep.subr.mxu0 0.0
    %93 = vmatpush2.msra.mxu0 0.0
    %94 = vmatprep.subr.mxu0 0.0
    %95 = vmatpush2.msra.mxu0 0.0
    %96 = vmatprep.subr.mxu0 0.0
    %97 = vmatpush2.msra.mxu0 0.0
    %98 = vmatprep.subr.mxu0 0.0
    %99 = vmatpush2.msra.mxu0 0.0
    %100 = vmatprep.subr.mxu0 0.0
    %101 = vmatpush2.msra.mxu0 0.0
    %102 = vmatprep.subr.mxu0 0.0
    %103 = vmatpush2.msra.mxu0 0.0
    %104 = vmatprep.subr.mxu0 0.0
    %105 = vmatpush2.msra.mxu0 0.0
    %106 = vmatprep.subr.mxu0 0.0
    %107 = vmatpush2.msra.mxu0 0.0
    %108 = vmatprep.subr.mxu0 0.0
    %109 = vmatpush2.msra.mxu0 0.0
    %110 = vmatprep.subr.mxu0 0.0
    %111 = vmatpush2.msra.mxu0 0.0
    %112 = vmatprep.subr.mxu0 0.0
    %113 = vmatpush2.msra.mxu0 0.0
    %114 = vmatprep.subr.mxu0 0.0
    %115 = vmatpush2.msra.mxu0 0.0
    %116 = vmatprep.subr.mxu0 0.0
    %117 = vmatpush2.msra.mxu0 0.0
    %118 = vmatprep.subr.mxu0 0.0
    %119 = vmatpush2.msra.mxu0 0.0
    %120 = vmatprep.mubr.f32.mxu0 0.0
    %121 = vmatmul.mubr.f32.gmra.mxu0 %v50
    %v122 = vpop.f32.mrf.mxu0
    %v123 = vadd.f32 %v46, %v122
    %v124 = vpop.f32.mrf.mxu0
    %125 = vdwg.mxu0
    %126 = vst.msk [vmem:[#allocation7] sm:$0xff] %vm48, %v123
    // Predicated region
    $region22: #{tpu_custom_call.1} parent=1 // pred_check
      _
    $region23: #{tpu_custom_call.1} parent=1 // pred_check_branch
      %128 = sbr.rel (0) target = $region25
    $region24: #{tpu_custom_call.1} parent=1 // pred_region
      %s130 = ssub.s32 128, 128
      %131 = vsyncadd [#allocation4], %s130
      %s133 = sshll.u32 [#allocation7], 4
      %s134 = int_to_ptr.vmem [resolvable:$true] %s133
      %136 = dma.vmem_to_hbm [thread:$0]  %s134, 128, %s3, [#allocation4]
    $region25: #{tpu_custom_call.1} parent=1 // pred_fallthru
      _
    // Predicated region
    $region26: #{tpu_custom_call.1} parent=1 // pred_check
      _
    $region27: #{tpu_custom_call.1} parent=1 // pred_check_branch
      %138 = sbr.rel (0) target = $region29
    $region28: #{tpu_custom_call.1} parent=1 // pred_region
      %139 = dma.done [#allocation4], 128
    $region29: #{tpu_custom_call.1} parent=1 // pred_fallthru
      _
    %140 = vsyncpa [#allocation3], 1
    %141 = vsyncpa [#allocation6], 1
    %142 = vsyncpa [#allocation4], 1

</llo_original>
